<compile_context>
chip_gen: v5e
topology: v5e:2x2
jax: 0.10.0
libtpu: 0.0.40
codegen_flags: <defaults>
</compile_context>

<pallas_src>
import math

import jax
import jax.numpy as jnp
from jax.experimental import pallas as pl
from jax.experimental.pallas import tpu as pltpu

FFN_NUM_HIDDENS = 512   # matches the PyTorch spec (ffn_num_hiddens = 512)
FFN_NUM_OUTPUTS = 256   # d2l BERT: FFN output dim == model num_hiddens
NUM_HIDDENS = 256       # input feature dim (LazyLinear infers this in PyTorch)


def _round_up(x, m):
    return ((x + m - 1) // m) * m


# --------------------------- Fused FFN kernel -------------------------------
def _ffn_kernel(x_ref, w1_ref, b1_ref, w2_ref, b2_ref, o_ref):
    # dense1: (tm, D_in) @ (D_in, H) on the MXU, f32 accumulation.
    h = jnp.dot(x_ref[...], w1_ref[...], preferred_element_type=jnp.float32)
    # bias + ReLU on the VPU (kept in f32; v5e has no bf16 VPU).
    h = jnp.maximum(h + b1_ref[...], 0.0)
    # dense2: (tm, H) @ (H, D_out) on the MXU, f32 accumulation.
    o = jnp.dot(h, w2_ref[...], preferred_element_type=jnp.float32)
    # D_out = 256 is lane-dense (multiple of 128) -> unmasked vst.
    o_ref[...] = (o + b2_ref[...]).astype(o_ref.dtype)


def position_wise_ffn(params, x, *, block_m=1024):
    """Fused dense1 -> ReLU -> dense2.  x: (..., D_in) float32."""
    w1, b1 = params["W1"], params["b1"]          # (D_in, H), (1, H)
    w2, b2 = params["W2"], params["b2"]          # (H, D_out), (1, D_out)
    d_in = x.shape[-1]
    hidden = w1.shape[1]
    d_out = w2.shape[1]
    lead = x.shape[:-1]

    x2 = x.reshape(-1, d_in)
    m = x2.shape[0]

    # Row-tile choice:
    #   * m >= block_m: MXU-aligned block_m-row tiles (block_m is a multiple of
    #     256); the ragged final block (if any) is clipped by Pallas.
    #   * m <  block_m: one sublane-aligned tile covering every row — no
    #     artificial split into tiny under-filled tiles.
    if m >= block_m:
        tm = block_m
    else:
        tm = _round_up(m, 8)

    grid = (pl.cdiv(m, tm),)

    out = pl.pallas_call(
        _ffn_kernel,
        out_shape=jax.ShapeDtypeStruct((m, d_out), x2.dtype),
        grid_spec=pltpu.PrefetchScalarGridSpec(
            num_scalar_prefetch=0,
            grid=grid,
            in_specs=[
                pl.BlockSpec((tm, d_in), lambda i: (i, 0)),       # x row tile
                pl.BlockSpec((d_in, hidden), lambda i: (0, 0)),   # W1 (resident)
                pl.BlockSpec((1, hidden), lambda i: (0, 0)),      # b1 (resident)
                pl.BlockSpec((hidden, d_out), lambda i: (0, 0)),  # W2 (resident)
                pl.BlockSpec((1, d_out), lambda i: (0, 0)),       # b2 (resident)
            ],
            out_specs=pl.BlockSpec((tm, d_out), lambda i: (i, 0)),
        ),
        compiler_params=pltpu.CompilerParams(
            dimension_semantics=("parallel",)),   # shards row tiles on v7x's 2 TCs
    )(x2, w1, b1, w2, b2)

    return out.reshape(*lead, d_out)


# ----------------------------- Pure-JAX reference ---------------------------
def _reference(params, x):
    # HIGHEST precision so the reference matmul is true f32 (TPU default
    # precision would be less accurate than the kernel's f32 MXU path).
    h = jnp.maximum(
        jnp.dot(x, params["W1"], precision=jax.lax.Precision.HIGHEST)
        + params["b1"][0], 0.0)
    return (jnp.dot(h, params["W2"], precision=jax.lax.Precision.HIGHEST)
            + params["b2"][0])


if __name__ == "__main__":
    B, L = 2, 8
    D_IN, H, D_OUT = NUM_HIDDENS, FFN_NUM_HIDDENS, FFN_NUM_OUTPUTS

    key = jax.random.PRNGKey(0)
    kx, kw1, kb1, kw2, kb2 = jax.random.split(key, 5)

    X = jax.random.normal(kx, (B, L, D_IN), dtype=jnp.float32)

    # PyTorch nn.Linear-style init: U(-1/sqrt(fan_in), 1/sqrt(fan_in)).
    s1 = 1.0 / math.sqrt(D_IN)
    s2 = 1.0 / math.sqrt(H)
    params = {
        "W1": jax.random.uniform(kw1, (D_IN, H), jnp.float32, -s1, s1),
        "b1": jax.random.uniform(kb1, (1, H), jnp.float32, -s1, s1),
        "W2": jax.random.uniform(kw2, (H, D_OUT), jnp.float32, -s2, s2),
        "b2": jax.random.uniform(kb2, (1, D_OUT), jnp.float32, -s2, s2),
    }

    out = jax.block_until_ready(position_wise_ffn(params, X))

    ref = _reference(params, X)
    assert out.shape == (B, L, D_OUT), out.shape
    err = float(jnp.max(jnp.abs(out - ref)))
    assert jnp.allclose(out, ref, atol=1e-4, rtol=1e-4), f"mismatch vs reference: {err}"

    print("KERNEL_OK")
</pallas_src>

<mosaic_0001>
module attributes {stable_mosaic.version = 11 : i64} {
  func.func @_ffn_kernel(%arg0: i32, %arg1: memref<16x256xf32, #tpu.memory_space<vmem>>, %arg2: memref<256x512xf32, #tpu.memory_space<vmem>>, %arg3: memref<1x512xf32, #tpu.memory_space<vmem>>, %arg4: memref<512x256xf32, #tpu.memory_space<vmem>>, %arg5: memref<1x256xf32, #tpu.memory_space<vmem>>, %arg6: memref<16x256xf32, #tpu.memory_space<vmem>>) attributes {dimension_semantics = [#tpu.dimension_semantics<parallel>], iteration_bounds = array<i64: 1>, scalar_prefetch = 0 : i64, scratch_operands = 0 : i64, tpu.core_type = #tpu.core_type<tc>, window_params = [{transform_indices = @transform_0, window_bounds = array<i64: 16, 256>}, {pipeline_mode = #tpu.pipeline_mode<synchronous>, transform_indices = @transform_1, window_bounds = array<i64: 256, 512>}, {pipeline_mode = #tpu.pipeline_mode<synchronous>, transform_indices = @transform_2, window_bounds = array<i64: 1, 512>}, {pipeline_mode = #tpu.pipeline_mode<synchronous>, transform_indices = @transform_3, window_bounds = array<i64: 512, 256>}, {pipeline_mode = #tpu.pipeline_mode<synchronous>, transform_indices = @transform_4, window_bounds = array<i64: 1, 256>}, {transform_indices = @transform_5, window_bounds = array<i64: 16, 256>}]} {
    %c0 = arith.constant 0 : index
    %c0_0 = arith.constant 0 : index
    %0 = vector.load %arg1[%c0, %c0_0] : memref<16x256xf32, #tpu.memory_space<vmem>>, vector<16x256xf32>
    %c0_1 = arith.constant 0 : index
    %c0_2 = arith.constant 0 : index
    %1 = vector.load %arg2[%c0_1, %c0_2] : memref<256x512xf32, #tpu.memory_space<vmem>>, vector<256x512xf32>
    %cst = arith.constant dense<0.000000e+00> : vector<16x512xf32>
    %2 = tpu.matmul %0, %1, %cst {dimension_numbers = #tpu.dot_dimension_numbers<[1], [0], [0], [1], [0, 0, 1, 1], [], []>} : vector<16x256xf32>, vector<256x512xf32>, vector<16x512xf32> -> vector<16x512xf32>
    %c0_3 = arith.constant 0 : index
    %c0_4 = arith.constant 0 : index
    %3 = vector.load %arg3[%c0_3, %c0_4] : memref<1x512xf32, #tpu.memory_space<vmem>>, vector<1x512xf32>
    %4 = vector.broadcast %3 : vector<1x512xf32> to vector<16x512xf32>
    %5 = arith.addf %2, %4 : vector<16x512xf32>
    %cst_5 = arith.constant 0.000000e+00 : f32
    %6 = vector.broadcast %cst_5 : f32 to vector<16x512xf32>
    %7 = arith.maximumf %5, %6 : vector<16x512xf32>
    %c0_6 = arith.constant 0 : index
    %c0_7 = arith.constant 0 : index
    %8 = vector.load %arg4[%c0_6, %c0_7] : memref<512x256xf32, #tpu.memory_space<vmem>>, vector<512x256xf32>
    %cst_8 = arith.constant dense<0.000000e+00> : vector<16x256xf32>
    %9 = tpu.matmul %7, %8, %cst_8 {dimension_numbers = #tpu.dot_dimension_numbers<[1], [0], [0], [1], [0, 0, 1, 1], [], []>} : vector<16x512xf32>, vector<512x256xf32>, vector<16x256xf32> -> vector<16x256xf32>
    %c0_9 = arith.constant 0 : index
    %c0_10 = arith.constant 0 : index
    %10 = vector.load %arg5[%c0_9, %c0_10] : memref<1x256xf32, #tpu.memory_space<vmem>>, vector<1x256xf32>
    %11 = vector.broadcast %10 : vector<1x256xf32> to vector<16x256xf32>
    %12 = arith.addf %9, %11 : vector<16x256xf32>
    %c0_11 = arith.constant 0 : index
    %c0_12 = arith.constant 0 : index
    %13 = vector.load %arg6[%c0_11, %c0_12] : memref<16x256xf32, #tpu.memory_space<vmem>>, vector<16x256xf32>
    tpu.vector_store %arg6[%c0_11, %c0_12], %12 {strides = array<i32>} : memref<16x256xf32, #tpu.memory_space<vmem>>, vector<16x256xf32>,
    return
  }
  func.func @transform_0(%arg0: i32) -> (i32, i32) {
    %c0_i32 = arith.constant 0 : i32
    %c0_i32_0 = arith.constant 0 : i32
    return %arg0, %c0_i32 : i32, i32
  }
  func.func @transform_1(%arg0: i32) -> (i32, i32) {
    %c0_i32 = arith.constant 0 : i32
    %c0_i32_0 = arith.constant 0 : i32
    %c0_i32_1 = arith.constant 0 : i32
    return %c0_i32, %c0_i32_0 : i32, i32
  }
  func.func @transform_2(%arg0: i32) -> (i32, i32) {
    %c0_i32 = arith.constant 0 : i32
    %c0_i32_0 = arith.constant 0 : i32
    %c0_i32_1 = arith.constant 0 : i32
    return %c0_i32, %c0_i32_0 : i32, i32
  }
  func.func @transform_3(%arg0: i32) -> (i32, i32) {
    %c0_i32 = arith.constant 0 : i32
    %c0_i32_0 = arith.constant 0 : i32
    %c0_i32_1 = arith.constant 0 : i32
    return %c0_i32, %c0_i32_0 : i32, i32
  }
  func.func @transform_4(%arg0: i32) -> (i32, i32) {
    %c0_i32 = arith.constant 0 : i32
    %c0_i32_0 = arith.constant 0 : i32
    %c0_i32_1 = arith.constant 0 : i32
    return %c0_i32, %c0_i32_0 : i32, i32
  }
  func.func @transform_5(%arg0: i32) -> (i32, i32) {
    %c0_i32 = arith.constant 0 : i32
    %c0_i32_0 = arith.constant 0 : i32
    return %arg0, %c0_i32 : i32, i32
  }
}

</mosaic_0001>

<llo_original>
// kernel: tpu_custom_call.1
$region0: #{tpu_custom_call.1}
  #allocation0 [shape = 'u32[]', space=smem, size = 0x4, offset = 0x4, fixed_abs, tag = 'smem constant byte address 0x4 - core index']
  #allocation1 [shape = 'u32[72,128]{1,0:T(1,128)}', space=vmem, size = 0x9000, scoped, tag = 'internal scratch']
  %s0 = inlined_call_operand.hbm [shape: f32[16,256], index: 0, kind: input, shape index: {}]
  %s1 = inlined_call_operand.hbm [shape: f32[256,512], index: 1, kind: input, shape index: {}]
  %s2 = inlined_call_operand.hbm [shape: f32[1,512], index: 2, kind: input, shape index: {}]
  %s3 = inlined_call_operand.hbm [shape: f32[512,256], index: 3, kind: input, shape index: {}]
  %s4 = inlined_call_operand.vmem [shape: f32[1,256], index: 4, kind: input, shape index: {}]
  %s5 = inlined_call_operand.hbm [shape: f32[16,256], index: 5, kind: output, shape index: {}]
  %s6 = sld [smem:[#allocation0]]
  $region46: #{tpu_custom_call.1} parent=0
    _
  %s8 = ssub.s32 1, %s6
  %s9 = scalar_select 0, %s8, %s6
  $region1: #{tpu_custom_call.1} parent=0
    #allocation2 [shape = 'u8[16384]{0}', space=vmem, size = 0x4000, scoped, tag = 'input window, operand 0, single buffered']
    #allocation3 [shape = 's32[1]{0}', space=sflag, size = 0x4, scoped, tag = 'scoped memory for tpu_custom_call.1']
    #allocation4 [shape = 's32[1]{0}', space=sflag, size = 0x4, scoped, tag = 'scoped memory for tpu_custom_call.1']
    #allocation5 [shape = 'u8[524288]{0}', space=vmem, size = 0x80000, scoped, tag = 'input window, operand 1, single buffered']
    #allocation6 [shape = 's32[1]{0}', space=sflag, size = 0x4, scoped, tag = 'scoped memory for tpu_custom_call.1']
    #allocation7 [shape = 'u8[2048]{0}', space=vmem, size = 0x800, scoped, tag = 'input window, operand 2, single buffered']
    #allocation8 [shape = 'u8[524288]{0}', space=vmem, size = 0x80000, scoped, tag = 'input window, operand 3, single buffered']
    #allocation9 [shape = 's32[1]{0}', space=sflag, size = 0x4, scoped, tag = 'scoped memory for tpu_custom_call.1']
    #allocation10 [shape = 'u8[16384]{0}', space=vmem, size = 0x4000, scoped, tag = 'output window, operand 0, single buffered']
    %10 = vsyncpa [#allocation3], 0
    %11 = vsyncpa [#allocation6], 0
    %12 = vsyncpa [#allocation9], 0
    %13 = vsyncpa [#allocation4], 0
    // Predicated region
    $region2: #{tpu_custom_call.1} parent=1 // pred_check
      _
    $region3: #{tpu_custom_call.1} parent=1 // pred_check_branch
      %15 = sbr.rel (0) target = $region5
    $region4: #{tpu_custom_call.1} parent=1 // pred_region
      %17 = vsyncadd [#allocation3], 0
      %s18 = sshll.u32 %s0, 4
      %s19 = int_to_ptr.hbm [resolvable:$true] %s18
      %s20 = sshll.u32 [#allocation2], 4
      %s21 = int_to_ptr.vmem [resolvable:$true] %s20
      %26 = dma.hbm_to_vmem [thread:$0]  %s19, 512, %s21, [#allocation3], 256, 256, 16
    $region5: #{tpu_custom_call.1} parent=1 // pred_fallthru
      _
    // Predicated region
    $region6: #{tpu_custom_call.1} parent=1 // pred_check
      _
    $region7: #{tpu_custom_call.1} parent=1 // pred_check_branch
      %28 = sbr.rel (0) target = $region9
    $region8: #{tpu_custom_call.1} parent=1 // pred_region
      %30 = vsyncadd [#allocation6], 0
      %s31 = sshll.u32 %s1, 4
      %s32 = int_to_ptr.hbm [resolvable:$true] %s31
      %s33 = sshll.u32 [#allocation5], 4
      %s34 = int_to_ptr.vmem [resolvable:$true] %s33
      %39 = dma.hbm_to_vmem [thread:$0]  %s32, 16384, %s34, [#allocation6], 512, 512, 32
    $region9: #{tpu_custom_call.1} parent=1 // pred_fallthru
      _
    // Predicated region
    $region10: #{tpu_custom_call.1} parent=1 // pred_check
      _
    $region11: #{tpu_custom_call.1} parent=1 // pred_check_branch
      %41 = sbr.rel (0) target = $region13
    $region12: #{tpu_custom_call.1} parent=1 // pred_region
      %43 = vsyncadd [#allocation6], 0
      %s45 = sshll.u32 %s2, 4
      %s46 = int_to_ptr.hbm [resolvable:$true] %s45
      %s47 = sshll.u32 [#allocation7], 4
      %s48 = int_to_ptr.vmem [resolvable:$true] %s47
      %50 = dma.hbm_to_vmem [thread:$0]  %s46, 64, %s48, [#allocation6]
    $region13: #{tpu_custom_call.1} parent=1 // pred_fallthru
      _
    // Predicated region
    $region14: #{tpu_custom_call.1} parent=1 // pred_check
      _
    $region15: #{tpu_custom_call.1} parent=1 // pred_check_branch
      %52 = sbr.rel (0) target = $region17
    $region16: #{tpu_custom_call.1} parent=1 // pred_region
      %54 = vsyncadd [#allocation9], 0
      %s55 = sshll.u32 %s3, 4
      %s56 = int_to_ptr.hbm [resolvable:$true] %s55
      %s57 = sshll.u32 [#allocation8], 4
      %s58 = int_to_ptr.vmem [resolvable:$true] %s57
      %63 = dma.hbm_to_vmem [thread:$0]  %s56, 16384, %s58, [#allocation9], 256, 256, 16
    $region17: #{tpu_custom_call.1} parent=1 // pred_fallthru
      _
    // Predicated region
    $region18: #{tpu_custom_call.1} parent=1 // pred_check
      _
    $region19: #{tpu_custom_call.1} parent=1 // pred_check_branch
      %65 = sbr.rel (0) target = $region21
    $region20: #{tpu_custom_call.1} parent=1 // pred_region
      _
    $region21: #{tpu_custom_call.1} parent=1 // pred_fallthru
      _
    // Predicated region
    $region22: #{tpu_custom_call.1} parent=1 // pred_check
      _
    $region23: #{tpu_custom_call.1} parent=1 // pred_check_branch
      %67 = sbr.rel (0) target = $region25
    $region24: #{tpu_custom_call.1} parent=1 // pred_region
      %69 = dma.done [#allocation3], 512
    $region25: #{tpu_custom_call.1} parent=1 // pred_fallthru
      _
    // Predicated region
    $region26: #{tpu_custom_call.1} parent=1 // pred_check
      _
    $region27: #{tpu_custom_call.1} parent=1 // pred_check_branch
      %71 = sbr.rel (0) target = $region29
    $region28: #{tpu_custom_call.1} parent=1 // pred_region
      %73 = dma.done [#allocation6], 16384
    $region29: #{tpu_custom_call.1} parent=1 // pred_fallthru
      _
    // Predicated region
    $region30: #{tpu_custom_call.1} parent=1 // pred_check
      _
    $region31: #{tpu_custom_call.1} parent=1 // pred_check_branch
      %75 = sbr.rel (0) target = $region33
    $region32: #{tpu_custom_call.1} parent=1 // pred_region
      %77 = dma.done [#allocation6], 64
    $region33: #{tpu_custom_call.1} parent=1 // pred_fallthru
      _
    // Predicated region
    $region34: #{tpu_custom_call.1} parent=1 // pred_check
      _
    $region35: #{tpu_custom_call.1} parent=1 // pred_check_branch
      %79 = sbr.rel (0) target = $region37
    $region36: #{tpu_custom_call.1} parent=1 // pred_region
      %81 = dma.done [#allocation9], 16384
    $region37: #{tpu_custom_call.1} parent=1 // pred_fallthru
      _
    %v82 = vld [vmem:[#allocation2] sm:$0xff]
    %v83 = vld [vmem:[#allocation2 + $0x8] sm:$0xff]
    %v84 = vld [vmem:[#allocation2 + $0x10] sm:$0xff]
    %v85 = vld [vmem:[#allocation2 + $0x18] sm:$0xff]
    %v86 = vld [vmem:[#allocation5] sm:$0xff]
    %v87 = vld [vmem:[#allocation5 + $0x8] sm:$0xff]
    %v88 = vld [vmem:[#allocation5 + $0x10] sm:$0xff]
    %v89 = vld [vmem:[#allocation5 + $0x18] sm:$0xff]
    %v90 = vld [vmem:[#allocation5 + $0x20] sm:$0xff]
    %v91 = vld [vmem:[#allocation5 + $0x28] sm:$0xff]
    %v92 = vld [vmem:[#allocation5 + $0x30] sm:$0xff]
    %v93 = vld [vmem:[#allocation5 + $0x38] sm:$0xff]
    %v94 = vld [vmem:[#allocation5 + $0x40] sm:$0xff]
    %v95 = vld [vmem:[#allocation5 + $0x48] sm:$0xff]
    %v96 = vld [vmem:[#allocation5 + $0x50] sm:$0xff]
    %v97 = vld [vmem:[#allocation5 + $0x58] sm:$0xff]
    %v98 = vld [vmem:[#allocation5 + $0x60] sm:$0xff]
    %v99 = vld [vmem:[#allocation5 + $0x68] sm:$0xff]
    %v100 = vld [vmem:[#allocation5 + $0x70] sm:$0xff]
    %v101 = vld [vmem:[#allocation5 + $0x78] sm:$0xff]
    %v102 = vld [vmem:[#allocation5 + $0x80] sm:$0xff]
    %v103 = vld [vmem:[#allocation5 + $0x88] sm:$0xff]
    %v104 = vld [vmem:[#allocation5 + $0x90] sm:$0xff]
    %v105 = vld [vmem:[#allocation5 + $0x98] sm:$0xff]
    %v106 = vld [vmem:[#allocation5 + $0xa0] sm:$0xff]
    %v107 = vld [vmem:[#allocation5 + $0xa8] sm:$0xff]
    %v108 = vld [vmem:[#allocation5 + $0xb0] sm:$0xff]
    %v109 = vld [vmem:[#allocation5 + $0xb8] sm:$0xff]
    %v110 = vld [vmem:[#allocation5 + $0xc0] sm:$0xff]
    %v111 = vld [vmem:[#allocation5 + $0xc8] sm:$0xff]
    %v112 = vld [vmem:[#allocation5 + $0xd0] sm:$0xff]
    %v113 = vld [vmem:[#allocation5 + $0xd8] sm:$0xff]
    %v114 = vld [vmem:[#allocation5 + $0xe0] sm:$0xff]
    %v115 = vld [vmem:[#allocation5 + $0xe8] sm:$0xff]
    %v116 = vld [vmem:[#allocation5 + $0xf0] sm:$0xff]
    %v117 = vld [vmem:[#allocation5 + $0xf8] sm:$0xff]
    %v118 = vld [vmem:[#allocation5 + $0x100] sm:$0xff]
    %v119 = vld [vmem:[#allocation5 + $0x108] sm:$0xff]
    %v120 = vld [vmem:[#allocation5 + $0x110] sm:$0xff]
    %v121 = vld [vmem:[#allocation5 + $0x118] sm:$0xff]
    %v122 = vld [vmem:[#allocation5 + $0x120] sm:$0xff]
    %v123 = vld [vmem:[#allocation5 + $0x128] sm:$0xff]
    %v124 = vld [vmem:[#allocation5 + $0x130] sm:$0xff]
    %v125 = vld [vmem:[#allocation5 + $0x138] sm:$0xff]
    %v126 = vld [vmem:[#allocation5 + $0x140] sm:$0xff]
    %v127 = vld [vmem:[#allocation5 + $0x148] sm:$0xff]
    %v128 = vld [vmem:[#allocation5 + $0x150] sm:$0xff]
    %v129 = vld [vmem:[#allocation5 + $0x158] sm:$0xff]
    %v130 = vld [vmem:[#allocation5 + $0x160] sm:$0xff]
    %v131 = vld [vmem:[#allocation5 + $0x168] sm:$0xff]
    %v132 = vld [vmem:[#allocation5 + $0x170] sm:$0xff]
    %v133 = vld [vmem:[#allocation5 + $0x178] sm:$0xff]
    %v134 = vld [vmem:[#allocation5 + $0x180] sm:$0xff]
    %v135 = vld [vmem:[#allocation5 + $0x188] sm:$0xff]
    %v136 = vld [vmem:[#allocation5 + $0x190] sm:$0xff]
    %v137 = vld [vmem:[#allocation5 + $0x198] sm:$0xff]
    %v138 = vld [vmem:[#allocation5 + $0x1a0] sm:$0xff]
    %v139 = vld [vmem:[#allocation5 + $0x1a8] sm:$0xff]
    %v140 = vld [vmem:[#allocation5 + $0x1b0] sm:$0xff]
    %v141 = vld [vmem:[#allocation5 + $0x1b8] sm:$0xff]
    %v142 = vld [vmem:[#allocation5 + $0x1c0] sm:$0xff]
    %v143 = vld [vmem:[#allocation5 + $0x1c8] sm:$0xff]
    %v144 = vld [vmem:[#allocation5 + $0x1d0] sm:$0xff]
    %v145 = vld [vmem:[#allocation5 + $0x1d8] sm:$0xff]
    %v146 = vld [vmem:[#allocation5 + $0x1e0] sm:$0xff]
    %v147 = vld [vmem:[#allocation5 + $0x1e8] sm:$0xff]
    %v148 = vld [vmem:[#allocation5 + $0x1f0] sm:$0xff]
    %v149 = vld [vmem:[#allocation5 + $0x1f8] sm:$0xff]
    %v150 = vld [vmem:[#allocation5 + $0x200] sm:$0xff]
    %v151 = vld [vmem:[#allocation5 + $0x208] sm:$0xff]
    %v152 = vld [vmem:[#allocation5 + $0x210] sm:$0xff]
    %v153 = vld [vmem:[#allocation5 + $0x218] sm:$0xff]
    %v154 = vld [vmem:[#allocation5 + $0x220] sm:$0xff]
    %v155 = vld [vmem:[#allocation5 + $0x228] sm:$0xff]
    %v156 = vld [vmem:[#allocation5 + $0x230] sm:$0xff]
    %v157 = vld [vmem:[#allocation5 + $0x238] sm:$0xff]
    %v158 = vld [vmem:[#allocation5 + $0x240] sm:$0xff]
    %v159 = vld [vmem:[#allocation5 + $0x248] sm:$0xff]
    %v160 = vld [vmem:[#allocation5 + $0x250] sm:$0xff]
    %v161 = vld [vmem:[#allocation5 + $0x258] sm:$0xff]
    %v162 = vld [vmem:[#allocation5 + $0x260] sm:$0xff]
    %v163 = vld [vmem:[#allocation5 + $0x268] sm:$0xff]
    %v164 = vld [vmem:[#allocation5 + $0x270] sm:$0xff]
    %v165 = vld [vmem:[#allocation5 + $0x278] sm:$0xff]
    %v166 = vld [vmem:[#allocation5 + $0x280] sm:$0xff]
    %v167 = vld [vmem:[#allocation5 + $0x288] sm:$0xff]
    %v168 = vld [vmem:[#allocation5 + $0x290] sm:$0xff]
    %v169 = vld [vmem:[#allocation5 + $0x298] sm:$0xff]
    %v170 = vld [vmem:[#allocation5 + $0x2a0] sm:$0xff]
    %v171 = vld [vmem:[#allocation5 + $0x2a8] sm:$0xff]
    %v172 = vld [vmem:[#allocation5 + $0x2b0] sm:$0xff]
    %v173 = vld [vmem:[#allocation5 + $0x2b8] sm:$0xff]
    %v174 = vld [vmem:[#allocation5 + $0x2c0] sm:$0xff]
    %v175 = vld [vmem:[#allocation5 + $0x2c8] sm:$0xff]
    %v176 = vld [vmem:[#allocation5 + $0x2d0] sm:$0xff]
    %v177 = vld [vmem:[#allocation5 + $0x2d8] sm:$0xff]
    %v178 = vld [vmem:[#allocation5 + $0x2e0] sm:$0xff]
    %v179 = vld [vmem:[#allocation5 + $0x2e8] sm:$0xff]
    %v180 = vld [vmem:[#allocation5 + $0x2f0] sm:$0xff]
    %v181 = vld [vmem:[#allocation5 + $0x2f8] sm:$0xff]
    %v182 = vld [vmem:[#allocation5 + $0x300] sm:$0xff]
    %v183 = vld [vmem:[#allocation5 + $0x308] sm:$0xff]
    %v184 = vld [vmem:[#allocation5 + $0x310] sm:$0xff]
    %v185 = vld [vmem:[#allocation5 + $0x318] sm:$0xff]
    %v186 = vld [vmem:[#allocation5 + $0x320] sm:$0xff]
    %v187 = vld [vmem:[#allocation5 + $0x328] sm:$0xff]
    %v188 = vld [vmem:[#allocation5 + $0x330] sm:$0xff]
    %v189 = vld [vmem:[#allocation5 + $0x338] sm:$0xff]
    %v190 = vld [vmem:[#allocation5 + $0x340] sm:$0xff]
    %v191 = vld [vmem:[#allocation5 + $0x348] sm:$0xff]
    %v192 = vld [vmem:[#allocation5 + $0x350] sm:$0xff]
    %v193 = vld [vmem:[#allocation5 + $0x358] sm:$0xff]
    %v194 = vld [vmem:[#allocation5 + $0x360] sm:$0xff]
    %v195 = vld [vmem:[#allocation5 + $0x368] sm:$0xff]
    %v196 = vld [vmem:[#allocation5 + $0x370] sm:$0xff]
    %v197 = vld [vmem:[#allocation5 + $0x378] sm:$0xff]
    %v198 = vld [vmem:[#allocation5 + $0x380] sm:$0xff]
    %v199 = vld [vmem:[#allocation5 + $0x388] sm:$0xff]
    %v200 = vld [vmem:[#allocation5 + $0x390] sm:$0xff]
    %v201 = vld [vmem:[#allocation5 + $0x398] sm:$0xff]
    %v202 = vld [vmem:[#allocation5 + $0x3a0] sm:$0xff]
    %v203 = vld [vmem:[#allocation5 + $0x3a8] sm:$0xff]
    %v204 = vld [vmem:[#allocation5 + $0x3b0] sm:$0xff]
    %v205 = vld [vmem:[#allocation5 + $0x3b8] sm:$0xff]
    %v206 = vld [vmem:[#allocation5 + $0x3c0] sm:$0xff]
    %v207 = vld [vmem:[#allocation5 + $0x3c8] sm:$0xff]
    %v208 = vld [vmem:[#allocation5 + $0x3d0] sm:$0xff]
    %v209 = vld [vmem:[#allocation5 + $0x3d8] sm:$0xff]
    %v210 = vld [vmem:[#allocation5 + $0x3e0] sm:$0xff]
    %v211 = vld [vmem:[#allocation5 + $0x3e8] sm:$0xff]
    %v212 = vld [vmem:[#allocation5 + $0x3f0] sm:$0xff]
    %v213 = vld [vmem:[#allocation5 + $0x3f8] sm:$0xff]
    %v214 = vld [vmem:[#allocation7] sm:$0xf]
    %v216 = vperm.slane %v214, 0
    %v217 = vperm.slane %v214, 1
    %v218 = vperm.slane %v214, 2
    %v219 = vperm.slane %v214, 3
    %224 = vmatpush.msra.mxu0 %v146
    %225 = vmatpush.msra.mxu0 %v142
    %226 = vmatpush.msra.mxu0 %v138
    %227 = vmatpush.msra.mxu0 %v134
    %228 = vmatpush.msra.mxu0 %v130
    %229 = vmatpush.msra.mxu0 %v126
    %230 = vmatpush.msra.mxu0 %v122
    %231 = vmatpush.msra.mxu0 %v118
    %232 = vmatpush.msra.mxu0 %v114
    %233 = vmatpush.msra.mxu0 %v110
    %234 = vmatpush.msra.mxu0 %v106
    %235 = vmatpush.msra.mxu0 %v102
    %236 = vmatpush.msra.mxu0 %v98
    %237 = vmatpush.msra.mxu0 %v94
    %238 = vmatpush.msra.mxu0 %v90
    %239 = vmatpush.msra.mxu0 %v86
    %240 = vmatmul.f32.gmra.mxu0 %v82
    %v241 = vpop.f32.mrf.mxu0
    %v242 = vadd.f32 %v216, %v241
    %243 = vmatmul.f32.gmra.mxu0 %v84
    %v244 = vpop.f32.mrf.mxu0
    %v245 = vadd.f32 %v216, %v244
    %246 = vdwg.mxu0
    %247 = vmatpush.msra.mxu0 %v210
    %248 = vmatpush.msra.mxu0 %v206
    %249 = vmatpush.msra.mxu0 %v202
    %250 = vmatpush.msra.mxu0 %v198
    %251 = vmatpush.msra.mxu0 %v194
    %252 = vmatpush.msra.mxu0 %v190
    %253 = vmatpush.msra.mxu0 %v186
    %254 = vmatpush.msra.mxu0 %v182
    %255 = vmatpush.msra.mxu0 %v178
    %256 = vmatpush.msra.mxu0 %v174
    %257 = vmatpush.msra.mxu0 %v170
    %258 = vmatpush.msra.mxu0 %v166
    %259 = vmatpush.msra.mxu0 %v162
    %260 = vmatpush.msra.mxu0 %v158
    %261 = vmatpush.msra.mxu0 %v154
    %262 = vmatpush.msra.mxu0 %v150
    %263 = vmatmul.f32.gmra.mxu0 %v83
    %v264 = vpop.f32.mrf.mxu0
    %v265 = vadd.f32 %v242, %v264
    %266 = vmatmul.f32.gmra.mxu0 %v85
    %v267 = vpop.f32.mrf.mxu0
    %v268 = vadd.f32 %v245, %v267
    %269 = vdwg.mxu0
    %270 = vmatpush.msra.mxu0 %v147
    %271 = vmatpush.msra.mxu0 %v143
    %272 = vmatpush.msra.mxu0 %v139
    %273 = vmatpush.msra.mxu0 %v135
    %274 = vmatpush.msra.mxu0 %v131
    %275 = vmatpush.msra.mxu0 %v127
    %276 = vmatpush.msra.mxu0 %v123
    %277 = vmatpush.msra.mxu0 %v119
    %278 = vmatpush.msra.mxu0 %v115
    %279 = vmatpush.msra.mxu0 %v111
    %280 = vmatpush.msra.mxu0 %v107
    %281 = vmatpush.msra.mxu0 %v103
    %282 = vmatpush.msra.mxu0 %v99
    %283 = vmatpush.msra.mxu0 %v95
    %284 = vmatpush.msra.mxu0 %v91
    %285 = vmatpush.msra.mxu0 %v87
    %286 = vmatmul.f32.gmra.mxu0 %v82
    %v287 = vpop.f32.mrf.mxu0
    %v288 = vadd.f32 %v217, %v287
    %289 = vmatmul.f32.gmra.mxu0 %v84
    %v290 = vpop.f32.mrf.mxu0
    %v291 = vadd.f32 %v217, %v290
    %292 = vdwg.mxu0
    %293 = vmatpush.msra.mxu0 %v211
    %294 = vmatpush.msra.mxu0 %v207
    %295 = vmatpush.msra.mxu0 %v203
    %296 = vmatpush.msra.mxu0 %v199
    %297 = vmatpush.msra.mxu0 %v195
    %298 = vmatpush.msra.mxu0 %v191
    %299 = vmatpush.msra.mxu0 %v187
    %300 = vmatpush.msra.mxu0 %v183
    %301 = vmatpush.msra.mxu0 %v179
    %302 = vmatpush.msra.mxu0 %v175
    %303 = vmatpush.msra.mxu0 %v171
    %304 = vmatpush.msra.mxu0 %v167
    %305 = vmatpush.msra.mxu0 %v163
    %306 = vmatpush.msra.mxu0 %v159
    %307 = vmatpush.msra.mxu0 %v155
    %308 = vmatpush.msra.mxu0 %v151
    %309 = vmatmul.f32.gmra.mxu0 %v83
    %v310 = vpop.f32.mrf.mxu0
    %v311 = vadd.f32 %v288, %v310
    %312 = vmatmul.f32.gmra.mxu0 %v85
    %v313 = vpop.f32.mrf.mxu0
    %v314 = vadd.f32 %v291, %v313
    %315 = vdwg.mxu0
    %316 = vmatpush.msra.mxu0 %v148
    %317 = vmatpush.msra.mxu0 %v144
    %318 = vmatpush.msra.mxu0 %v140
    %319 = vmatpush.msra.mxu0 %v136
    %320 = vmatpush.msra.mxu0 %v132
    %321 = vmatpush.msra.mxu0 %v128
    %322 = vmatpush.msra.mxu0 %v124
    %323 = vmatpush.msra.mxu0 %v120
    %324 = vmatpush.msra.mxu0 %v116
    %325 = vmatpush.msra.mxu0 %v112
    %326 = vmatpush.msra.mxu0 %v108
    %327 = vmatpush.msra.mxu0 %v104
    %328 = vmatpush.msra.mxu0 %v100
    %329 = vmatpush.msra.mxu0 %v96
    %330 = vmatpush.msra.mxu0 %v92
    %331 = vmatpush.msra.mxu0 %v88
    %332 = vmatmul.f32.gmra.mxu0 %v82
    %v333 = vpop.f32.mrf.mxu0
    %v334 = vadd.f32 %v218, %v333
    %335 = vmatmul.f32.gmra.mxu0 %v84
    %v336 = vpop.f32.mrf.mxu0
    %v337 = vadd.f32 %v218, %v336
    %338 = vdwg.mxu0
    %339 = vmatpush.msra.mxu0 %v212
    %340 = vmatpush.msra.mxu0 %v208
    %341 = vmatpush.msra.mxu0 %v204
    %342 = vmatpush.msra.mxu0 %v200
    %343 = vmatpush.msra.mxu0 %v196
    %344 = vmatpush.msra.mxu0 %v192
    %345 = vmatpush.msra.mxu0 %v188
    %346 = vmatpush.msra.mxu0 %v184
    %347 = vmatpush.msra.mxu0 %v180
    %348 = vmatpush.msra.mxu0 %v176
    %349 = vmatpush.msra.mxu0 %v172
    %350 = vmatpush.msra.mxu0 %v168
    %351 = vmatpush.msra.mxu0 %v164
    %352 = vmatpush.msra.mxu0 %v160
    %353 = vmatpush.msra.mxu0 %v156
    %354 = vmatpush.msra.mxu0 %v152
    %355 = vmatmul.f32.gmra.mxu0 %v83
    %v356 = vpop.f32.mrf.mxu0
    %v357 = vadd.f32 %v334, %v356
    %358 = vmatmul.f32.gmra.mxu0 %v85
    %v359 = vpop.f32.mrf.mxu0
    %v360 = vadd.f32 %v337, %v359
    %361 = vdwg.mxu0
    %362 = vmatpush.msra.mxu0 %v149
    %363 = vmatpush.msra.mxu0 %v145
    %364 = vmatpush.msra.mxu0 %v141
    %365 = vmatpush.msra.mxu0 %v137
    %366 = vmatpush.msra.mxu0 %v133
    %367 = vmatpush.msra.mxu0 %v129
    %368 = vmatpush.msra.mxu0 %v125
    %369 = vmatpush.msra.mxu0 %v121
    %370 = vmatpush.msra.mxu0 %v117
    %371 = vmatpush.msra.mxu0 %v113
    %372 = vmatpush.msra.mxu0 %v109
    %373 = vmatpush.msra.mxu0 %v105
    %374 = vmatpush.msra.mxu0 %v101
    %375 = vmatpush.msra.mxu0 %v97
    %376 = vmatpush.msra.mxu0 %v93
    %377 = vmatpush.msra.mxu0 %v89
    %378 = vmatmul.f32.gmra.mxu0 %v82
    %v379 = vpop.f32.mrf.mxu0
    %v380 = vadd.f32 %v219, %v379
    %381 = vmatmul.f32.gmra.mxu0 %v84
    %v382 = vpop.f32.mrf.mxu0
    %v383 = vadd.f32 %v219, %v382
    %384 = vdwg.mxu0
    %385 = vmatpush.msra.mxu0 %v213
    %386 = vmatpush.msra.mxu0 %v209
    %387 = vmatpush.msra.mxu0 %v205
    %388 = vmatpush.msra.mxu0 %v201
    %389 = vmatpush.msra.mxu0 %v197
    %390 = vmatpush.msra.mxu0 %v193
    %391 = vmatpush.msra.mxu0 %v189
    %392 = vmatpush.msra.mxu0 %v185
    %393 = vmatpush.msra.mxu0 %v181
    %394 = vmatpush.msra.mxu0 %v177
    %395 = vmatpush.msra.mxu0 %v173
    %396 = vmatpush.msra.mxu0 %v169
    %397 = vmatpush.msra.mxu0 %v165
    %398 = vmatpush.msra.mxu0 %v161
    %399 = vmatpush.msra.mxu0 %v157
    %400 = vmatpush.msra.mxu0 %v153
    %401 = vmatmul.f32.gmra.mxu0 %v83
    %v402 = vpop.f32.mrf.mxu0
    %v403 = vadd.f32 %v380, %v402
    %404 = vmatmul.f32.gmra.mxu0 %v85
    %v405 = vpop.f32.mrf.mxu0
    %v406 = vadd.f32 %v383, %v405
    %407 = vdwg.mxu0
    %v408 = vmax.f32 %v265, 0.0
    %v409 = vmax.f32 %v311, 0.0
    %v410 = vmax.f32 %v357, 0.0
    %v411 = vmax.f32 %v403, 0.0
    %v412 = vmax.f32 %v268, 0.0
    %v413 = vmax.f32 %v314, 0.0
    %v414 = vmax.f32 %v360, 0.0
    %v415 = vmax.f32 %v406, 0.0
    %v416 = vld [vmem:[#allocation8] sm:$0xff]
    %v417 = vld [vmem:[#allocation8 + $0x8] sm:$0xff]
    %v418 = vld [vmem:[#allocation8 + $0x10] sm:$0xff]
    %v419 = vld [vmem:[#allocation8 + $0x18] sm:$0xff]
    %v420 = vld [vmem:[#allocation8 + $0x20] sm:$0xff]
    %v421 = vld [vmem:[#allocation8 + $0x28] sm:$0xff]
    %v422 = vld [vmem:[#allocation8 + $0x30] sm:$0xff]
    %v423 = vld [vmem:[#allocation8 + $0x38] sm:$0xff]
    %v424 = vld [vmem:[#allocation8 + $0x40] sm:$0xff]
    %v425 = vld [vmem:[#allocation8 + $0x48] sm:$0xff]
    %v426 = vld [vmem:[#allocation8 + $0x50] sm:$0xff]
    %v427 = vld [vmem:[#allocation8 + $0x58] sm:$0xff]
    %v428 = vld [vmem:[#allocation8 + $0x60] sm:$0xff]
    %v429 = vld [vmem:[#allocation8 + $0x68] sm:$0xff]
    %v430 = vld [vmem:[#allocation8 + $0x70] sm:$0xff]
    %v431 = vld [vmem:[#allocation8 + $0x78] sm:$0xff]
    %v432 = vld [vmem:[#allocation8 + $0x80] sm:$0xff]
    %v433 = vld [vmem:[#allocation8 + $0x88] sm:$0xff]
    %v434 = vld [vmem:[#allocation8 + $0x90] sm:$0xff]
    %v435 = vld [vmem:[#allocation8 + $0x98] sm:$0xff]
    %v436 = vld [vmem:[#allocation8 + $0xa0] sm:$0xff]
    %v437 = vld [vmem:[#allocation8 + $0xa8] sm:$0xff]
    %v438 = vld [vmem:[#allocation8 + $0xb0] sm:$0xff]
    %v439 = vld [vmem:[#allocation8 + $0xb8] sm:$0xff]
    %v440 = vld [vmem:[#allocation8 + $0xc0] sm:$0xff]
    %v441 = vld [vmem:[#allocation8 + $0xc8] sm:$0xff]
    %v442 = vld [vmem:[#allocation8 + $0xd0] sm:$0xff]
    %v443 = vld [vmem:[#allocation8 + $0xd8] sm:$0xff]
    %v444 = vld [vmem:[#allocation8 + $0xe0] sm:$0xff]
    %v445 = vld [vmem:[#allocation8 + $0xe8] sm:$0xff]
    %v446 = vld [vmem:[#allocation8 + $0xf0] sm:$0xff]
    %v447 = vld [vmem:[#allocation8 + $0xf8] sm:$0xff]
    %v448 = vld [vmem:[#allocation8 + $0x100] sm:$0xff]
    %v449 = vld [vmem:[#allocation8 + $0x108] sm:$0xff]
    %v450 = vld [vmem:[#allocation8 + $0x110] sm:$0xff]
    %v451 = vld [vmem:[#allocation8 + $0x118] sm:$0xff]
    %v452 = vld [vmem:[#allocation8 + $0x120] sm:$0xff]
    %v453 = vld [vmem:[#allocation8 + $0x128] sm:$0xff]
    %v454 = vld [vmem:[#allocation8 + $0x130] sm:$0xff]
    %v455 = vld [vmem:[#allocation8 + $0x138] sm:$0xff]
    %v456 = vld [vmem:[#allocation8 + $0x140] sm:$0xff]
    %v457 = vld [vmem:[#allocation8 + $0x148] sm:$0xff]
    %v458 = vld [vmem:[#allocation8 + $0x150] sm:$0xff]
    %v459 = vld [vmem:[#allocation8 + $0x158] sm:$0xff]
    %v460 = vld [vmem:[#allocation8 + $0x160] sm:$0xff]
    %v461 = vld [vmem:[#allocation8 + $0x168] sm:$0xff]
    %v462 = vld [vmem:[#allocation8 + $0x170] sm:$0xff]
    %v463 = vld [vmem:[#allocation8 + $0x178] sm:$0xff]
    %v464 = vld [vmem:[#allocation8 + $0x180] sm:$0xff]
    %v465 = vld [vmem:[#allocation8 + $0x188] sm:$0xff]
    %v466 = vld [vmem:[#allocation8 + $0x190] sm:$0xff]
    %v467 = vld [vmem:[#allocation8 + $0x198] sm:$0xff]
    %v468 = vld [vmem:[#allocation8 + $0x1a0] sm:$0xff]
    %v469 = vld [vmem:[#allocation8 + $0x1a8] sm:$0xff]
    %v470 = vld [vmem:[#allocation8 + $0x1b0] sm:$0xff]
    %v471 = vld [vmem:[#allocation8 + $0x1b8] sm:$0xff]
    %v472 = vld [vmem:[#allocation8 + $0x1c0] sm:$0xff]
    %v473 = vld [vmem:[#allocation8 + $0x1c8] sm:$0xff]
    %v474 = vld [vmem:[#allocation8 + $0x1d0] sm:$0xff]
    %v475 = vld [vmem:[#allocation8 + $0x1d8] sm:$0xff]
    %v476 = vld [vmem:[#allocation8 + $0x1e0] sm:$0xff]
    %v477 = vld [vmem:[#allocation8 + $0x1e8] sm:$0xff]
    %v478 = vld [vmem:[#allocation8 + $0x1f0] sm:$0xff]
    %v479 = vld [vmem:[#allocation8 + $0x1f8] sm:$0xff]
    %v480 = vld [vmem:[#allocation8 + $0x200] sm:$0xff]
    %v481 = vld [vmem:[#allocation8 + $0x208] sm:$0xff]
    %v482 = vld [vmem:[#allocation8 + $0x210] sm:$0xff]
    %v483 = vld [vmem:[#allocation8 + $0x218] sm:$0xff]
    %v484 = vld [vmem:[#allocation8 + $0x220] sm:$0xff]
    %v485 = vld [vmem:[#allocation8 + $0x228] sm:$0xff]
    %v486 = vld [vmem:[#allocation8 + $0x230] sm:$0xff]
    %v487 = vld [vmem:[#allocation8 + $0x238] sm:$0xff]
    %v488 = vld [vmem:[#allocation8 + $0x240] sm:$0xff]
    %v489 = vld [vmem:[#allocation8 + $0x248] sm:$0xff]
    %v490 = vld [vmem:[#allocation8 + $0x250] sm:$0xff]
    %v491 = vld [vmem:[#allocation8 + $0x258] sm:$0xff]
    %v492 = vld [vmem:[#allocation8 + $0x260] sm:$0xff]
    %v493 = vld [vmem:[#allocation8 + $0x268] sm:$0xff]
    %v494 = vld [vmem:[#allocation8 + $0x270] sm:$0xff]
    %v495 = vld [vmem:[#allocation8 + $0x278] sm:$0xff]
    %v496 = vld [vmem:[#allocation8 + $0x280] sm:$0xff]
    %v497 = vld [vmem:[#allocation8 + $0x288] sm:$0xff]
    %v498 = vld [vmem:[#allocation8 + $0x290] sm:$0xff]
    %v499 = vld [vmem:[#allocation8 + $0x298] sm:$0xff]
    %v500 = vld [vmem:[#allocation8 + $0x2a0] sm:$0xff]
    %v501 = vld [vmem:[#allocation8 + $0x2a8] sm:$0xff]
    %v502 = vld [vmem:[#allocation8 + $0x2b0] sm:$0xff]
    %v503 = vld [vmem:[#allocation8 + $0x2b8] sm:$0xff]
    %v504 = vld [vmem:[#allocation8 + $0x2c0] sm:$0xff]
    %v505 = vld [vmem:[#allocation8 + $0x2c8] sm:$0xff]
    %v506 = vld [vmem:[#allocation8 + $0x2d0] sm:$0xff]
    %v507 = vld [vmem:[#allocation8 + $0x2d8] sm:$0xff]
    %v508 = vld [vmem:[#allocation8 + $0x2e0] sm:$0xff]
    %v509 = vld [vmem:[#allocation8 + $0x2e8] sm:$0xff]
    %v510 = vld [vmem:[#allocation8 + $0x2f0] sm:$0xff]
    %v511 = vld [vmem:[#allocation8 + $0x2f8] sm:$0xff]
    %v512 = vld [vmem:[#allocation8 + $0x300] sm:$0xff]
    %v513 = vld [vmem:[#allocation8 + $0x308] sm:$0xff]
    %v514 = vld [vmem:[#allocation8 + $0x310] sm:$0xff]
    %v515 = vld [vmem:[#allocation8 + $0x318] sm:$0xff]
    %v516 = vld [vmem:[#allocation8 + $0x320] sm:$0xff]
    %v517 = vld [vmem:[#allocation8 + $0x328] sm:$0xff]
    %v518 = vld [vmem:[#allocation8 + $0x330] sm:$0xff]
    %v519 = vld [vmem:[#allocation8 + $0x338] sm:$0xff]
    %v520 = vld [vmem:[#allocation8 + $0x340] sm:$0xff]
    %v521 = vld [vmem:[#allocation8 + $0x348] sm:$0xff]
    %v522 = vld [vmem:[#allocation8 + $0x350] sm:$0xff]
    %v523 = vld [vmem:[#allocation8 + $0x358] sm:$0xff]
    %v524 = vld [vmem:[#allocation8 + $0x360] sm:$0xff]
    %v525 = vld [vmem:[#allocation8 + $0x368] sm:$0xff]
    %v526 = vld [vmem:[#allocation8 + $0x370] sm:$0xff]
    %v527 = vld [vmem:[#allocation8 + $0x378] sm:$0xff]
    %v528 = vld [vmem:[#allocation8 + $0x380] sm:$0xff]
    %v529 = vld [vmem:[#allocation8 + $0x388] sm:$0xff]
    %v530 = vld [vmem:[#allocation8 + $0x390] sm:$0xff]
    %v531 = vld [vmem:[#allocation8 + $0x398] sm:$0xff]
    %v532 = vld [vmem:[#allocation8 + $0x3a0] sm:$0xff]
    %v533 = vld [vmem:[#allocation8 + $0x3a8] sm:$0xff]
    %v534 = vld [vmem:[#allocation8 + $0x3b0] sm:$0xff]
    %v535 = vld [vmem:[#allocation8 + $0x3b8] sm:$0xff]
    %v536 = vld [vmem:[#allocation8 + $0x3c0] sm:$0xff]
    %v537 = vld [vmem:[#allocation8 + $0x3c8] sm:$0xff]
    %v538 = vld [vmem:[#allocation8 + $0x3d0] sm:$0xff]
    %v539 = vld [vmem:[#allocation8 + $0x3d8] sm:$0xff]
    %v540 = vld [vmem:[#allocation8 + $0x3e0] sm:$0xff]
    %v541 = vld [vmem:[#allocation8 + $0x3e8] sm:$0xff]
    %v542 = vld [vmem:[#allocation8 + $0x3f0] sm:$0xff]
    %v543 = vld [vmem:[#allocation8 + $0x3f8] sm:$0xff]
    %v544 = vld [vmem:[%s4] sm:$0x3]
    %v546 = vperm.slane %v544, 0
    %v547 = vperm.slane %v544, 1
    %550 = vmatpush.msra.mxu0 %v446
    %551 = vmatpush.msra.mxu0 %v444
    %552 = vmatpush.msra.mxu0 %v442
    %553 = vmatpush.msra.mxu0 %v440
    %554 = vmatpush.msra.mxu0 %v438
    %555 = vmatpush.msra.mxu0 %v436
    %556 = vmatpush.msra.mxu0 %v434
    %557 = vmatpush.msra.mxu0 %v432
    %558 = vmatpush.msra.mxu0 %v430
    %559 = vmatpush.msra.mxu0 %v428
    %560 = vmatpush.msra.mxu0 %v426
    %561 = vmatpush.msra.mxu0 %v424
    %562 = vmatpush.msra.mxu0 %v422
    %563 = vmatpush.msra.mxu0 %v420
    %564 = vmatpush.msra.mxu0 %v418
    %565 = vmatpush.msra.mxu0 %v416
    %566 = vmatmul.f32.gmra.mxu0 %v408
    %v567 = vpop.f32.mrf.mxu0
    %v568 = vadd.f32 %v546, %v567
    %569 = vmatmul.f32.gmra.mxu0 %v412
    %v570 = vpop.f32.mrf.mxu0
    %v571 = vadd.f32 %v546, %v570
    %572 = vdwg.mxu0
    %573 = vmatpush.msra.mxu0 %v478
    %574 = vmatpush.msra.mxu0 %v476
    %575 = vmatpush.msra.mxu0 %v474
    %576 = vmatpush.msra.mxu0 %v472
    %577 = vmatpush.msra.mxu0 %v470
    %578 = vmatpush.msra.mxu0 %v468
    %579 = vmatpush.msra.mxu0 %v466
    %580 = vmatpush.msra.mxu0 %v464
    %581 = vmatpush.msra.mxu0 %v462
    %582 = vmatpush.msra.mxu0 %v460
    %583 = vmatpush.msra.mxu0 %v458
    %584 = vmatpush.msra.mxu0 %v456
    %585 = vmatpush.msra.mxu0 %v454
    %586 = vmatpush.msra.mxu0 %v452
    %587 = vmatpush.msra.mxu0 %v450
    %588 = vmatpush.msra.mxu0 %v448
    %589 = vmatmul.f32.gmra.mxu0 %v409
    %v590 = vpop.f32.mrf.mxu0
    %v591 = vadd.f32 %v568, %v590
    %592 = vmatmul.f32.gmra.mxu0 %v413
    %v593 = vpop.f32.mrf.mxu0
    %v594 = vadd.f32 %v571, %v593
    %595 = vdwg.mxu0
    %596 = vmatpush.msra.mxu0 %v510
    %597 = vmatpush.msra.mxu0 %v508
    %598 = vmatpush.msra.mxu0 %v506
    %599 = vmatpush.msra.mxu0 %v504
    %600 = vmatpush.msra.mxu0 %v502
    %601 = vmatpush.msra.mxu0 %v500
    %602 = vmatpush.msra.mxu0 %v498
    %603 = vmatpush.msra.mxu0 %v496
    %604 = vmatpush.msra.mxu0 %v494
    %605 = vmatpush.msra.mxu0 %v492
    %606 = vmatpush.msra.mxu0 %v490
    %607 = vmatpush.msra.mxu0 %v488
    %608 = vmatpush.msra.mxu0 %v486
    %609 = vmatpush.msra.mxu0 %v484
    %610 = vmatpush.msra.mxu0 %v482
    %611 = vmatpush.msra.mxu0 %v480
    %612 = vmatmul.f32.gmra.mxu0 %v410
    %v613 = vpop.f32.mrf.mxu0
    %v614 = vadd.f32 %v591, %v613
    %615 = vmatmul.f32.gmra.mxu0 %v414
    %v616 = vpop.f32.mrf.mxu0
    %v617 = vadd.f32 %v594, %v616
    %618 = vdwg.mxu0
    %619 = vmatpush.msra.mxu0 %v542
    %620 = vmatpush.msra.mxu0 %v540
    %621 = vmatpush.msra.mxu0 %v538
    %622 = vmatpush.msra.mxu0 %v536
    %623 = vmatpush.msra.mxu0 %v534
    %624 = vmatpush.msra.mxu0 %v532
    %625 = vmatpush.msra.mxu0 %v530
    %626 = vmatpush.msra.mxu0 %v528
    %627 = vmatpush.msra.mxu0 %v526
    %628 = vmatpush.msra.mxu0 %v524
    %629 = vmatpush.msra.mxu0 %v522
    %630 = vmatpush.msra.mxu0 %v520
    %631 = vmatpush.msra.mxu0 %v518
    %632 = vmatpush.msra.mxu0 %v516
    %633 = vmatpush.msra.mxu0 %v514
    %634 = vmatpush.msra.mxu0 %v512
    %635 = vmatmul.f32.gmra.mxu0 %v411
    %v636 = vpop.f32.mrf.mxu0
    %v637 = vadd.f32 %v614, %v636
    %638 = vmatmul.f32.gmra.mxu0 %v415
    %v639 = vpop.f32.mrf.mxu0
    %v640 = vadd.f32 %v617, %v639
    %641 = vdwg.mxu0
    %642 = vmatpush.msra.mxu0 %v447
    %643 = vmatpush.msra.mxu0 %v445
    %644 = vmatpush.msra.mxu0 %v443
    %645 = vmatpush.msra.mxu0 %v441
    %646 = vmatpush.msra.mxu0 %v439
    %647 = vmatpush.msra.mxu0 %v437
    %648 = vmatpush.msra.mxu0 %v435
    %649 = vmatpush.msra.mxu0 %v433
    %650 = vmatpush.msra.mxu0 %v431
    %651 = vmatpush.msra.mxu0 %v429
    %652 = vmatpush.msra.mxu0 %v427
    %653 = vmatpush.msra.mxu0 %v425
    %654 = vmatpush.msra.mxu0 %v423
    %655 = vmatpush.msra.mxu0 %v421
    %656 = vmatpush.msra.mxu0 %v419
    %657 = vmatpush.msra.mxu0 %v417
    %658 = vmatmul.f32.gmra.mxu0 %v408
    %v659 = vpop.f32.mrf.mxu0
    %v660 = vadd.f32 %v547, %v659
    %661 = vmatmul.f32.gmra.mxu0 %v412
    %v662 = vpop.f32.mrf.mxu0
    %v663 = vadd.f32 %v547, %v662
    %664 = vdwg.mxu0
    %665 = vmatpush.msra.mxu0 %v479
    %666 = vmatpush.msra.mxu0 %v477
    %667 = vmatpush.msra.mxu0 %v475
    %668 = vmatpush.msra.mxu0 %v473
    %669 = vmatpush.msra.mxu0 %v471
    %670 = vmatpush.msra.mxu0 %v469
    %671 = vmatpush.msra.mxu0 %v467
    %672 = vmatpush.msra.mxu0 %v465
    %673 = vmatpush.msra.mxu0 %v463
    %674 = vmatpush.msra.mxu0 %v461
    %675 = vmatpush.msra.mxu0 %v459
    %676 = vmatpush.msra.mxu0 %v457
    %677 = vmatpush.msra.mxu0 %v455
    %678 = vmatpush.msra.mxu0 %v453
    %679 = vmatpush.msra.mxu0 %v451
    %680 = vmatpush.msra.mxu0 %v449
    %681 = vmatmul.f32.gmra.mxu0 %v409
    %v682 = vpop.f32.mrf.mxu0
    %v683 = vadd.f32 %v660, %v682
    %684 = vmatmul.f32.gmra.mxu0 %v413
    %v685 = vpop.f32.mrf.mxu0
    %v686 = vadd.f32 %v663, %v685
    %687 = vdwg.mxu0
    %688 = vmatpush.msra.mxu0 %v511
    %689 = vmatpush.msra.mxu0 %v509
    %690 = vmatpush.msra.mxu0 %v507
    %691 = vmatpush.msra.mxu0 %v505
    %692 = vmatpush.msra.mxu0 %v503
    %693 = vmatpush.msra.mxu0 %v501
    %694 = vmatpush.msra.mxu0 %v499
    %695 = vmatpush.msra.mxu0 %v497
    %696 = vmatpush.msra.mxu0 %v495
    %697 = vmatpush.msra.mxu0 %v493
    %698 = vmatpush.msra.mxu0 %v491
    %699 = vmatpush.msra.mxu0 %v489
    %700 = vmatpush.msra.mxu0 %v487
    %701 = vmatpush.msra.mxu0 %v485
    %702 = vmatpush.msra.mxu0 %v483
    %703 = vmatpush.msra.mxu0 %v481
    %704 = vmatmul.f32.gmra.mxu0 %v410
    %v705 = vpop.f32.mrf.mxu0
    %v706 = vadd.f32 %v683, %v705
    %707 = vmatmul.f32.gmra.mxu0 %v414
    %v708 = vpop.f32.mrf.mxu0
    %v709 = vadd.f32 %v686, %v708
    %710 = vdwg.mxu0
    %711 = vmatpush.msra.mxu0 %v543
    %712 = vmatpush.msra.mxu0 %v541
    %713 = vmatpush.msra.mxu0 %v539
    %714 = vmatpush.msra.mxu0 %v537
    %715 = vmatpush.msra.mxu0 %v535
    %716 = vmatpush.msra.mxu0 %v533
    %717 = vmatpush.msra.mxu0 %v531
    %718 = vmatpush.msra.mxu0 %v529
    %719 = vmatpush.msra.mxu0 %v527
    %720 = vmatpush.msra.mxu0 %v525
    %721 = vmatpush.msra.mxu0 %v523
    %722 = vmatpush.msra.mxu0 %v521
    %723 = vmatpush.msra.mxu0 %v519
    %724 = vmatpush.msra.mxu0 %v517
    %725 = vmatpush.msra.mxu0 %v515
    %726 = vmatpush.msra.mxu0 %v513
    %727 = vmatmul.f32.gmra.mxu0 %v411
    %v728 = vpop.f32.mrf.mxu0
    %v729 = vadd.f32 %v706, %v728
    %730 = vmatmul.f32.gmra.mxu0 %v415
    %v731 = vpop.f32.mrf.mxu0
    %v732 = vadd.f32 %v709, %v731
    %733 = vdwg.mxu0
    %734 = vst [vmem:[#allocation10] sm:$0xff] %v637
    %735 = vst [vmem:[#allocation10 + $0x8] sm:$0xff] %v729
    %736 = vst [vmem:[#allocation10 + $0x10] sm:$0xff] %v640
    %737 = vst [vmem:[#allocation10 + $0x18] sm:$0xff] %v732
    // Predicated region
    $region38: #{tpu_custom_call.1} parent=1 // pred_check
      _
    $region39: #{tpu_custom_call.1} parent=1 // pred_check_branch
      %739 = sbr.rel (0) target = $region41
    $region40: #{tpu_custom_call.1} parent=1 // pred_region
      %741 = vsyncadd [#allocation4], 0
      %s742 = sshll.u32 [#allocation10], 4
      %s743 = int_to_ptr.vmem [resolvable:$true] %s742
      %s744 = sshll.u32 %s5, 4
      %s745 = int_to_ptr.hbm [resolvable:$true] %s744
      %750 = dma.vmem_to_hbm [thread:$0]  %s743, 512, %s745, [#allocation4], 256, 256, 16
    $region41: #{tpu_custom_call.1} parent=1 // pred_fallthru
      _
    // Predicated region
    $region42: #{tpu_custom_call.1} parent=1 // pred_check
      _
    $region43: #{tpu_custom_call.1} parent=1 // pred_check_branch
      %752 = sbr.rel (0) target = $region45
    $region44: #{tpu_custom_call.1} parent=1 // pred_region
      %754 = dma.done [#allocation4], 512
    $region45: #{tpu_custom_call.1} parent=1 // pred_fallthru
      _
    %755 = vsyncpa [#allocation3], 1
    %756 = vsyncpa [#allocation6], 1
    %757 = vsyncpa [#allocation9], 1
    %758 = vsyncpa [#allocation4], 1

</llo_original>
